<compile_context>
chip_gen: v5e
topology: v5e:2x2
jax: 0.10.0
libtpu: 0.0.40
codegen_flags: <defaults>
</compile_context>

<pallas_src>
import jax
import jax.numpy as jnp
from jax.experimental import pallas as pl
from jax.experimental.pallas import tpu as pltpu


def _round_up(n: int, m: int) -> int:
    return ((n + m - 1) // m) * m


# ---------------------------------------------------------------------------
# Fast path: a_size == 2, transposed lane-dense layout.
# ---------------------------------------------------------------------------
def _policy2_kernel(xT_ref, w1_ref, aux_ref, out_ref):
    """One batch tile in transposed layout.

    xT_ref : [S, TB]   states, batch on the 128-lane axis
    w1_ref : [H, S]    fc1 weight (PyTorch [out, in] layout)
    aux_ref: [H, 3]    col0 = b1, col1 = w2[1]-w2[0], aux[0,2] = b2[1]-b2[0]
    out_ref: [2, TB]   probs, lane-dense (row a = P(action=a))
    """
    xT = xT_ref[...]
    w1 = w1_ref[...]
    b1 = aux_ref[:, 0:1]                      # [H, 1]
    w2d = aux_ref[:, 1:2]                     # [H, 1]
    b2d = aux_ref[0:1, 2:3]                   # [1, 1]

    # fc1 + ReLU: [H, S] @ [S, TB] -> [H, TB]; full 128-lane MXU utilisation.
    hT = jnp.dot(w1, xT, preferred_element_type=jnp.float32)
    hT = jnp.maximum(hT + b1, 0.0)

    # fc2 collapses to the logit difference d = l1 - l0 (no MXU, VPU + 16-row
    # sublane reduce).
    d = jnp.sum(hT * w2d, axis=0, keepdims=True) + b2d          # [1, TB]

    # 2-class softmax closed form: p1 = sigmoid(d), p0 = 1 - p1 (VPU + EUP).
    p1 = 1.0 / (1.0 + jnp.exp(-d))
    p0 = 1.0 - p1
    out_ref[0:1, :] = p0.astype(out_ref.dtype)
    out_ref[1:2, :] = p1.astype(out_ref.dtype)


# ---------------------------------------------------------------------------
# Fallback: generic a_size, standard [batch, feature] layout.
# ---------------------------------------------------------------------------
def _policy_general_kernel(x_ref, w1_ref, b1_ref, w2_ref, b2_ref, out_ref):
    x = x_ref[...]                                               # [TB, S]
    h = jnp.dot(x, w1_ref[...], preferred_element_type=jnp.float32)
    h = jnp.maximum(h + b1_ref[...], 0.0)                        # [TB, H]
    logits = jnp.dot(h.astype(w2_ref.dtype), w2_ref[...],
                     preferred_element_type=jnp.float32)
    logits = logits + b2_ref[...]                                # [TB, A]
    m = jnp.max(logits, axis=1, keepdims=True)
    e = jnp.exp(logits - m)
    denom = jnp.sum(e, axis=1, keepdims=True)
    out_ref[...] = (e * pl.reciprocal(denom, approx=True)).astype(out_ref.dtype)


# ---------------------------------------------------------------------------
# Wrapper
# ---------------------------------------------------------------------------
def policy_forward(x, w1, b1, w2, b2, *, block_b=512, compute_dtype=None,
                   interpret=False):
    """Forward pass of the REINFORCE `Policy` module.

    Args (PyTorch nn.Linear layouts):
      x : [B, s_size] float32
      w1: [h_size, s_size], b1: [h_size]     (fc1)
      w2: [a_size, h_size], b2: [a_size]     (fc2)
    Returns:
      probs: [B, a_size] float32, softmax over the action axis.
    """
    B, S = x.shape
    H, S_w = w1.shape
    A, H_w = w2.shape
    assert S_w == S and H_w == H and b1.shape == (H,) and b2.shape == (A,)

    # Batch tile: multiple of 128 so batch can sit on the lane axis and every
    # BlockSpec satisfies the (8, 128) constraint.
    tb = int(block_b) if B > int(block_b) else max(128, _round_up(B, 128))
    tb = _round_up(tb, 128)
    b_pad = _round_up(B, tb)
    grid = (b_pad // tb,)

    mm_dtype = jnp.dtype(compute_dtype) if compute_dtype is not None else jnp.float32
    cparams = pltpu.CompilerParams(dimension_semantics=("parallel",))

    if A == 2:
        # Lane-dense transposed layout: batch on lanes, probs stored as [2, B].
        xT = jnp.transpose(x).astype(mm_dtype)                  # [S, B]
        if b_pad != B:
            xT = jnp.pad(xT, ((0, 0), (0, b_pad - B)))
        w1c = w1.astype(mm_dtype)                                # [H, S]
        w2d = (w2[1, :] - w2[0, :]).astype(jnp.float32)          # [H]
        b2d = (b2[1] - b2[0]).astype(jnp.float32)
        aux = jnp.stack(
            [b1.astype(jnp.float32), w2d,
             jnp.zeros((H,), jnp.float32).at[0].set(b2d)],
            axis=1)                                              # [H, 3]

        outT = pl.pallas_call(
            _policy2_kernel,
            out_shape=jax.ShapeDtypeStruct((2, b_pad), jnp.float32),
            grid=grid,
            in_specs=[
                pl.BlockSpec((S, tb), lambda i: (0, i)),   # x tile streams
                pl.BlockSpec((H, S), lambda i: (0, 0)),    # resident weight
                pl.BlockSpec((H, 3), lambda i: (0, 0)),    # resident aux
            ],
            out_specs=pl.BlockSpec((2, tb), lambda i: (0, i)),
            compiler_params=cparams,
            interpret=interpret,
        )(xT, w1c, aux)
        return jnp.transpose(outT[:, :B])                        # [B, 2]

    # Generic a_size fallback.
    xp = x.astype(mm_dtype)
    if b_pad != B:
        xp = jnp.pad(xp, ((0, b_pad - B), (0, 0)))
    w1_io = jnp.transpose(w1).astype(mm_dtype)                   # [S, H]
    w2_io = jnp.transpose(w2).astype(mm_dtype)                   # [H, A]
    b1_2d = b1.astype(jnp.float32).reshape(1, H)
    b2_2d = b2.astype(jnp.float32).reshape(1, A)

    out = pl.pallas_call(
        _policy_general_kernel,
        out_shape=jax.ShapeDtypeStruct((b_pad, A), jnp.float32),
        grid=grid,
        in_specs=[
            pl.BlockSpec((tb, S), lambda i: (i, 0)),
            pl.BlockSpec((S, H), lambda i: (0, 0)),
            pl.BlockSpec((1, H), lambda i: (0, 0)),
            pl.BlockSpec((H, A), lambda i: (0, 0)),
            pl.BlockSpec((1, A), lambda i: (0, 0)),
        ],
        out_specs=pl.BlockSpec((tb, A), lambda i: (i, 0)),
        compiler_params=cparams,
        interpret=interpret,
    )(xp, w1_io, b1_2d, w2_io, b2_2d)
    return out[:B]


# ---------------------------------------------------------------------------
# Reference + init
# ---------------------------------------------------------------------------
def _reference(x, w1, b1, w2, b2):
    h = jnp.maximum(x @ w1.T + b1, 0.0)
    return jax.nn.softmax(h @ w2.T + b2, axis=1)


def init_params(key, s_size=4, h_size=16, a_size=2):
    """nn.Linear default init (U[-1/sqrt(fan_in), +1/sqrt(fan_in)]), PyTorch layout."""
    k1, k2, k3, k4 = jax.random.split(key, 4)
    bound1 = 1.0 / jnp.sqrt(s_size)
    bound2 = 1.0 / jnp.sqrt(h_size)
    w1 = jax.random.uniform(k1, (h_size, s_size), jnp.float32, -bound1, bound1)
    b1 = jax.random.uniform(k2, (h_size,), jnp.float32, -bound1, bound1)
    w2 = jax.random.uniform(k3, (a_size, h_size), jnp.float32, -bound2, bound2)
    b2 = jax.random.uniform(k4, (a_size,), jnp.float32, -bound2, bound2)
    return w1, b1, w2, b2


if __name__ == "__main__":
    key = jax.random.PRNGKey(0)
    k_x, k_p, k_x2, k_p4 = jax.random.split(key, 4)

    # Module configuration from the spec: s_size=4, h_size=16, a_size=2.
    S, H, A = 4, 16, 2
    w1, b1, w2, b2 = init_params(k_p, s_size=S, h_size=H, a_size=A)

    # 1) Tiny batch (like Policy.act): B=2, single padded tile.
    x_small = jax.random.normal(k_x, (2, S), dtype=jnp.float32)
    probs_small = jax.block_until_ready(policy_forward(x_small, w1, b1, w2, b2))
    ref_small = _reference(x_small, w1, b1, w2, b2)
    assert probs_small.shape == (2, A)
    assert jnp.allclose(probs_small, ref_small, atol=1e-5), "small-batch mismatch"
    assert jnp.allclose(jnp.sum(probs_small, axis=1), 1.0, atol=1e-5)

    # 2) Large batch: exercises the batch-tiled grid (4 x 512-row tiles).
    x_big = jax.random.normal(k_x2, (2048, S), dtype=jnp.float32)
    probs_big = jax.block_until_ready(policy_forward(x_big, w1, b1, w2, b2))
    ref_big = _reference(x_big, w1, b1, w2, b2)
    assert probs_big.shape == (2048, A)
    assert jnp.allclose(probs_big, ref_big, atol=1e-5), "large-batch mismatch"

    # 3) bf16 matmul inputs (f32 accumulation) for large-batch inference.
    probs_bf16 = jax.block_until_ready(
        policy_forward(x_big, w1, b1, w2, b2, compute_dtype=jnp.bfloat16))
    assert jnp.allclose(probs_bf16, ref_big, atol=3e-2), "bf16 path mismatch"

    # 4) Generic a_size fallback path (a_size=4).
    w1g, b1g, w2g, b2g = init_params(k_p4, s_size=S, h_size=H, a_size=4)
    probs_gen = jax.block_until_ready(policy_forward(x_small, w1g, b1g, w2g, b2g))
    ref_gen = _reference(x_small, w1g, b1g, w2g, b2g)
    assert probs_gen.shape == (2, 4)
    assert jnp.allclose(probs_gen, ref_gen, atol=5e-3), "generic path mismatch"

    print("KERNEL_OK")
</pallas_src>

<mosaic_0001>
module attributes {stable_mosaic.version = 11 : i64} {
  func.func @_policy2_kernel(%arg0: i32, %arg1: memref<4x128xf32, #tpu.memory_space<vmem>>, %arg2: memref<16x4xf32, #tpu.memory_space<vmem>>, %arg3: memref<16x3xf32, #tpu.memory_space<vmem>>, %arg4: memref<2x128xf32, #tpu.memory_space<vmem>>) attributes {dimension_semantics = [#tpu.dimension_semantics<parallel>], iteration_bounds = array<i64: 1>, scalar_prefetch = 0 : i64, scratch_operands = 0 : i64, tpu.core_type = #tpu.core_type<tc>, window_params = [{transform_indices = @transform_0, window_bounds = array<i64: 4, 128>}, {pipeline_mode = #tpu.pipeline_mode<synchronous>, transform_indices = @transform_1, window_bounds = array<i64: 16, 4>}, {pipeline_mode = #tpu.pipeline_mode<synchronous>, transform_indices = @transform_2, window_bounds = array<i64: 16, 3>}, {transform_indices = @transform_3, window_bounds = array<i64: 2, 128>}]} {
    %c0 = arith.constant 0 : index
    %c0_0 = arith.constant 0 : index
    %0 = vector.load %arg1[%c0, %c0_0] : memref<4x128xf32, #tpu.memory_space<vmem>>, vector<4x128xf32>
    %c0_1 = arith.constant 0 : index
    %c0_2 = arith.constant 0 : index
    %1 = vector.load %arg2[%c0_1, %c0_2] : memref<16x4xf32, #tpu.memory_space<vmem>>, vector<16x4xf32>
    %c0_3 = arith.constant 0 : index
    %c0_4 = arith.constant 0 : index
    %2 = vector.load %arg3[%c0_3, %c0_4] : memref<16x3xf32, #tpu.memory_space<vmem>>, vector<16x1xf32>
    %c0_5 = arith.constant 0 : index
    %c1 = arith.constant 1 : index
    %3 = vector.load %arg3[%c0_5, %c1] : memref<16x3xf32, #tpu.memory_space<vmem>>, vector<16x1xf32>
    %c0_6 = arith.constant 0 : index
    %c2 = arith.constant 2 : index
    %4 = vector.load %arg3[%c0_6, %c2] : memref<16x3xf32, #tpu.memory_space<vmem>>, vector<1x1xf32>
    %cst = arith.constant dense<0.000000e+00> : vector<16x128xf32>
    %5 = tpu.matmul %1, %0, %cst {dimension_numbers = #tpu.dot_dimension_numbers<[1], [0], [0], [1], [0, 0, 1, 1], [], []>} : vector<16x4xf32>, vector<4x128xf32>, vector<16x128xf32> -> vector<16x128xf32>
    %6 = vector.broadcast %2 : vector<16x1xf32> to vector<16x128xf32>
    %7 = arith.addf %5, %6 : vector<16x128xf32>
    %cst_7 = arith.constant 0.000000e+00 : f32
    %8 = vector.broadcast %cst_7 : f32 to vector<16x128xf32>
    %9 = arith.maximumf %7, %8 : vector<16x128xf32>
    %10 = vector.broadcast %3 : vector<16x1xf32> to vector<16x128xf32>
    %11 = arith.mulf %9, %10 : vector<16x128xf32>
    %cst_8 = arith.constant dense<0.000000e+00> : vector<128xf32>
    %12 = vector.multi_reduction <add>, %11, %cst_8 [0] : vector<16x128xf32> to vector<128xf32>
    %13 = vector.shape_cast %12 : vector<128xf32> to vector<1x128xf32>
    %14 = vector.broadcast %4 : vector<1x1xf32> to vector<1x128xf32>
    %15 = arith.addf %13, %14 : vector<1x128xf32>
    %cst_9 = arith.constant 0.000000e+00 : f32
    %16 = vector.broadcast %cst_9 : f32 to vector<1x128xf32>
    %17 = arith.subf %16, %15 : vector<1x128xf32>
    %18 = math.exp %17 : vector<1x128xf32>
    %cst_10 = arith.constant 1.000000e+00 : f32
    %19 = vector.broadcast %cst_10 : f32 to vector<1x128xf32>
    %20 = arith.addf %19, %18 : vector<1x128xf32>
    %cst_11 = arith.constant 1.000000e+00 : f32
    %21 = vector.broadcast %cst_11 : f32 to vector<1x128xf32>
    %22 = arith.divf %21, %20 : vector<1x128xf32>
    %cst_12 = arith.constant 1.000000e+00 : f32
    %23 = vector.broadcast %cst_12 : f32 to vector<1x128xf32>
    %24 = arith.subf %23, %22 : vector<1x128xf32>
    %c0_13 = arith.constant 0 : index
    %c0_14 = arith.constant 0 : index
    %25 = vector.load %arg4[%c0_13, %c0_14] : memref<2x128xf32, #tpu.memory_space<vmem>>, vector<1x128xf32>
    tpu.vector_store %arg4[%c0_13, %c0_14], %24 {strides = array<i32>} : memref<2x128xf32, #tpu.memory_space<vmem>>, vector<1x128xf32>,
    %c1_15 = arith.constant 1 : index
    %c0_16 = arith.constant 0 : index
    %26 = vector.load %arg4[%c1_15, %c0_16] : memref<2x128xf32, #tpu.memory_space<vmem>>, vector<1x128xf32>
    tpu.vector_store %arg4[%c1_15, %c0_16], %22 {strides = array<i32>} : memref<2x128xf32, #tpu.memory_space<vmem>>, vector<1x128xf32>,
    return
  }
  func.func @transform_0(%arg0: i32) -> (i32, i32) {
    %c0_i32 = arith.constant 0 : i32
    %c0_i32_0 = arith.constant 0 : i32
    return %c0_i32, %arg0 : i32, i32
  }
  func.func @transform_1(%arg0: i32) -> (i32, i32) {
    %c0_i32 = arith.constant 0 : i32
    %c0_i32_0 = arith.constant 0 : i32
    %c0_i32_1 = arith.constant 0 : i32
    return %c0_i32, %c0_i32_0 : i32, i32
  }
  func.func @transform_2(%arg0: i32) -> (i32, i32) {
    %c0_i32 = arith.constant 0 : i32
    %c0_i32_0 = arith.constant 0 : i32
    %c0_i32_1 = arith.constant 0 : i32
    return %c0_i32, %c0_i32_0 : i32, i32
  }
  func.func @transform_3(%arg0: i32) -> (i32, i32) {
    %c0_i32 = arith.constant 0 : i32
    %c0_i32_0 = arith.constant 0 : i32
    return %c0_i32, %arg0 : i32, i32
  }
}

</mosaic_0001>

<llo_original>
// kernel: tpu_custom_call.1
$region0: #{tpu_custom_call.1}
  #allocation0 [shape = 'u32[]', space=smem, size = 0x4, offset = 0x4, fixed_abs, tag = 'smem constant byte address 0x4 - core index']
  #allocation1 [shape = 'u32[72,128]{1,0:T(1,128)}', space=vmem, size = 0x9000, scoped, tag = 'internal scratch']
  %s0 = inlined_call_operand.vmem [shape: f32[4,128], index: 0, kind: input, shape index: {}]
  %s1 = inlined_call_operand.vmem [shape: f32[16,4], index: 1, kind: input, shape index: {}]
  %s2 = inlined_call_operand.vmem [shape: f32[16,3], index: 2, kind: input, shape index: {}]
  %s3 = inlined_call_operand.hbm [shape: f32[2,128], index: 3, kind: output, shape index: {}]
  %s4 = sld [smem:[#allocation0]]
  $region22: #{tpu_custom_call.1} parent=0
    _
  %s6 = ssub.s32 1, %s4
  %s7 = scalar_select 0, %s6, %s4
  $region1: #{tpu_custom_call.1} parent=0
    #allocation2 [shape = 'u8[1024]{0}', space=vmem, size = 0x400, scoped, tag = 'output window, operand 0, single buffered']
    #allocation3 [shape = 's32[1]{0}', space=sflag, size = 0x4, scoped, tag = 'scoped memory for tpu_custom_call.1']
    %8 = vsyncpa [#allocation3], 0
    // Predicated region
    $region2: #{tpu_custom_call.1} parent=1 // pred_check
      _
    $region3: #{tpu_custom_call.1} parent=1 // pred_check_branch
      %10 = sbr.rel (0) target = $region5
    $region4: #{tpu_custom_call.1} parent=1 // pred_region
      _
    $region5: #{tpu_custom_call.1} parent=1 // pred_fallthru
      _
    // Predicated region
    $region6: #{tpu_custom_call.1} parent=1 // pred_check
      _
    $region7: #{tpu_custom_call.1} parent=1 // pred_check_branch
      %12 = sbr.rel (0) target = $region9
    $region8: #{tpu_custom_call.1} parent=1 // pred_region
      _
    $region9: #{tpu_custom_call.1} parent=1 // pred_fallthru
      _
    // Predicated region
    $region10: #{tpu_custom_call.1} parent=1 // pred_check
      _
    $region11: #{tpu_custom_call.1} parent=1 // pred_check_branch
      %14 = sbr.rel (0) target = $region13
    $region12: #{tpu_custom_call.1} parent=1 // pred_region
      _
    $region13: #{tpu_custom_call.1} parent=1 // pred_fallthru
      _
    %v15 = vld [vmem:[%s0] sm:$0xf]
    %v16 = vld [vmem:[%s1] sm:$0xff]
    %v17 = vld [vmem:[%s1 + $0x8] sm:$0xff]
    %v18 = vld [vmem:[%s2] sm:$0xff]
    %v19 = vld [vmem:[%s2 + $0x8] sm:$0xff]
    %v20 = vld [vmem:[%s2] sm:$0x1]
    %22 = vset.pattern.permute.xlu0 0
    %23 = vperm.xlu0 %22, %v18
    %v24 = vpop.permute.xlu0 %23
    %27 = vset.pattern.permute.xlu0 0
    %28 = vperm.xlu0 %27, %v19
    %v29 = vpop.permute.xlu0 %28
    %vm31 = vcmask 31744
    %v33 = vsel %vm31, %v16, 0
    %v36 = vsel %vm31, %v17, 0
    %vm38 = vcmask 1043456
    %v40 = vsel %vm38, %v15, 0
    %42 = vmatpush.msra.mxu0 0.0
    %43 = vmatpush.msra.mxu0 0.0
    %44 = vmatpush.msra.mxu0 0.0
    %45 = vmatpush.msra.mxu0 0.0
    %46 = vmatpush.msra.mxu0 0.0
    %47 = vmatpush.msra.mxu0 0.0
    %48 = vmatpush.msra.mxu0 0.0
    %49 = vmatpush.msra.mxu0 0.0
    %50 = vmatpush.msra.mxu0 0.0
    %51 = vmatpush.msra.mxu0 0.0
    %52 = vmatpush.msra.mxu0 0.0
    %53 = vmatpush.msra.mxu0 0.0
    %54 = vmatpush.msra.mxu0 0.0
    %55 = vmatpush.msra.mxu0 0.0
    %56 = vmatpush.msra.mxu0 0.0
    %57 = vmatpush.msra.mxu0 %v40
    %58 = vmatmul.f32.gmra.mxu0 %v33
    %v59 = vpop.f32.mrf.mxu0
    %v60 = vadd.f32 %v24, %v59
    %61 = vmatmul.f32.gmra.mxu0 %v36
    %v62 = vpop.f32.mrf.mxu0
    %v63 = vadd.f32 %v29, %v62
    %64 = vdwg.mxu0
    %v65 = vmax.f32 %v60, 0.0
    %v66 = vmax.f32 %v63, 0.0
    %67 = vset.pattern.permute.xlu0 1
    %68 = vperm.xlu0 %67, %v18
    %v69 = vpop.permute.xlu0 %68
    %71 = vset.pattern.permute.xlu0 1
    %72 = vperm.xlu0 %71, %v19
    %v73 = vpop.permute.xlu0 %72
    %v75 = vmul.f32 %v65, %v69
    %v76 = vmul.f32 %v66, %v73
    %v77 = vadd.f32 %v75, %v76
    %v78 = vrot.slane %v77, 4
    %v79 = vadd.f32 %v77, %v78
    %v80 = vrot.slane %v79, 2
    %v81 = vadd.f32 %v79, %v80
    %v82 = vrot.slane %v81, 1
    %v83 = vadd.f32 %v81, %v82
    %85 = vset.pattern.permute.xlu0 2
    %86 = vperm.xlu0 %85, %v20
    %v87 = vpop.permute.xlu0 %86
    %v89 = vadd.f32 %v83, %v87
    %v90 = vsub.f32 0.0, %v89
    %v91 = vmul.f32 %v90, 1.442695
    %v92 = vpow.pop %v91
    %v93 = vadd.f32 %v92, 1.0
    %v94 = vrcp.pop %v93
    %v95 = vmul.f32 %v93, %v94
    %v96 = vsub.f32 1.0, %v95
    %v97 = vmul.f32 %v94, %v96
    %v98 = vadd.f32 %v94, %v97
    %vm99 = vweird.f32 %v93
    %vm100 = vweird.f32 %v94
    %vm101 = vmor %vm99, %vm100
    %v102 = vsel %vm101, %v94, %v98
    %v103 = vand.u32 2147483647, %v93
    %vm104 = vcmp.eq.f32.partialorder %v103, 8.507059e+37
    %v105 = vand.u32 %v93, 2147483648
    %v106 = vor.u32 1.1754944e-38, %v105
    %v107 = vsel %vm104, %v106, %v102
    %v108 = vmul.f32 1.0, %v107
    %v109 = vsub.f32 1.0, %v108
    %110 = vst [vmem:[#allocation2] sm:$0x1] %v109
    %111 = vst [vmem:[#allocation2 + $0x1] sm:$0x1] %v108
    // Predicated region
    $region14: #{tpu_custom_call.1} parent=1 // pred_check
      _
    $region15: #{tpu_custom_call.1} parent=1 // pred_check_branch
      %113 = sbr.rel (0) target = $region17
    $region16: #{tpu_custom_call.1} parent=1 // pred_region
      %115 = vsyncadd [#allocation3], 0
      %s117 = sshll.u32 [#allocation2], 4
      %s118 = int_to_ptr.vmem [resolvable:$true] %s117
      %s119 = sshll.u32 %s3, 4
      %s120 = int_to_ptr.hbm [resolvable:$true] %s119
      %122 = dma.vmem_to_hbm [thread:$0]  %s118, 32, %s120, [#allocation3]
    $region17: #{tpu_custom_call.1} parent=1 // pred_fallthru
      _
    // Predicated region
    $region18: #{tpu_custom_call.1} parent=1 // pred_check
      _
    $region19: #{tpu_custom_call.1} parent=1 // pred_check_branch
      %124 = sbr.rel (0) target = $region21
    $region20: #{tpu_custom_call.1} parent=1 // pred_region
      %126 = dma.done [#allocation3], 32
    $region21: #{tpu_custom_call.1} parent=1 // pred_fallthru
      _
    %127 = vsyncpa [#allocation3], 1

</llo_original>
